<compile_context>
chip_gen: v7x
topology: tpu7x:2x2x1
jax: 0.10.0
libtpu: 0.0.40
codegen_flags: <defaults>
</compile_context>

<pallas_src>
import jax
import jax.numpy as jnp
from jax import lax
from jax.experimental import pallas as pl
from jax.experimental.pallas import tpu as pltpu

# ---- config (CFG_DICT stand-in, small synthetic sizes) ----
NUM_ITEMS = 64
NUM_GENRES = 18
EMB_SIZE = 32
BATCH = 8
SEQ = 1  # forward only reads data[:, 0, :]

_SMALL_BATCH = 512  # below this, grid/pipeline machinery doesn't pay for itself


def _item_rep_kernel(row_ref, w_row_ref, w_emb_ref, b_ref, out_ref):
    """out = row @ w_row + one_hot(year) @ w_emb + b   (no concat, one dense store).

    row_ref:   [TB, F]              float32 (VMEM) - data[:, 0, :] rows (F = 2 + NUM_GENRES)
    w_row_ref: [F, 2*E]             float32 (VMEM) - zeros in rows 0..1, lin_weight.T in right half
    w_emb_ref: [NUM_ITEMS, 2*E]     float32 (VMEM) - embedding table in left half, zeros right
    b_ref:     [1, 2*E]             float32 (VMEM) - zeros left half, linear bias right half
    out_ref:   [TB, 2*E]            float32 (VMEM)
    """
    tb = out_ref.shape[0]
    num_items = w_emb_ref.shape[0]

    row = row_ref[...]                                        # [TB, F]
    # Year index: column 1, truncating cast (matches torch .to(torch.long)).
    idx = row[:, 1:2].astype(jnp.int32)                       # [TB, 1]

    # Embedding lookup as a one-hot matmul against the packed embedding table.
    iota = lax.broadcasted_iota(jnp.int32, (tb, num_items), 1)
    onehot = (iota == idx).astype(jnp.float32)                # [TB, NUM_ITEMS]

    # Two small MXU pushes, one f32 accumulate, one contiguous store.
    out_ref[...] = (
        jnp.dot(row, w_row_ref[...], preferred_element_type=jnp.float32)
        + jnp.dot(onehot, w_emb_ref[...], preferred_element_type=jnp.float32)
        + b_ref[...]
    )


def pack_item_rep_params(emb_table, lin_weight, lin_bias, num_feat_cols=None):
    """One-time parameter packing (do at init, NOT inside the traced forward).

    emb_table:  [NUM_ITEMS, E]    - year embedding table
    lin_weight: [E, NUM_GENRES]   - PyTorch nn.Linear layout
    lin_bias:   [E]
    returns:
      w_row  [F, 2E]          rows 0..1 zero, rows 2.. = lin_weight.T in columns E:2E
      w_emb  [NUM_ITEMS, 2E]  emb_table in columns 0:E
      b      [1, 2E]          lin_bias in columns E:2E
    where F = 2 + NUM_GENRES (the raw data row is used directly as the genre-side LHS).
    """
    num_items, e = emb_table.shape
    num_genres = lin_weight.shape[1]
    f = num_feat_cols if num_feat_cols is not None else 2 + num_genres

    w_row = jnp.zeros((f, 2 * e), jnp.float32)
    w_row = w_row.at[2:2 + num_genres, e:].set(lin_weight.T.astype(jnp.float32))

    w_emb = jnp.zeros((num_items, 2 * e), jnp.float32)
    w_emb = w_emb.at[:, :e].set(emb_table.astype(jnp.float32))

    b = jnp.zeros((1, 2 * e), jnp.float32).at[:, e:].set(lin_bias.astype(jnp.float32))
    return w_row, w_emb, b


def initial_recommender_item_rep(data, w_row, w_emb, b_packed, *, tile_b=1024):
    """JAX/Pallas equivalent of InitialRecommenderItemRep.forward.

    data:     [B, S, 2 + NUM_GENRES] (only [:, 0, :] is read)
    w_row:    [2 + NUM_GENRES, 2*E] float32 (from pack_item_rep_params)
    w_emb:    [NUM_ITEMS, 2*E] float32
    b_packed: [1, 2*E] float32
    returns:  [B, 2*E] float32
    """
    b = data.shape[0]
    f = data.shape[2]
    out_dim = w_row.shape[1]

    # Seq dim sliced OUTSIDE the kernel: a dense 2-D [B, F] slab is what gets DMA'd.
    row = data[:, 0, :].astype(jnp.float32)                   # [B, F]

    if b < _SMALL_BATCH:
        # Small batch: single-shot call, whole arrays in VMEM, no grid machinery.
        return pl.pallas_call(
            _item_rep_kernel,
            out_shape=jax.ShapeDtypeStruct((b, out_dim), jnp.float32),
            in_specs=[
                pl.BlockSpec(memory_space=pltpu.MemorySpace.VMEM),
                pl.BlockSpec(memory_space=pltpu.MemorySpace.VMEM),
                pl.BlockSpec(memory_space=pltpu.MemorySpace.VMEM),
                pl.BlockSpec(memory_space=pltpu.MemorySpace.VMEM),
            ],
            out_specs=pl.BlockSpec(memory_space=pltpu.MemorySpace.VMEM),
        )(row, w_row, w_emb, b_packed)

    # Large batch: pipelined grid over rows; weights/bias resident across steps.
    # >= 2 grid steps so both v7x TensorCores get work (no-op on v5e/v6e).
    tb = min(tile_b, b // 2)
    tb = max(8, (tb // 8) * 8)                                # sublane-aligned tile
    steps = pl.cdiv(b, tb)
    b_pad = steps * tb
    if b_pad != b:
        row = jnp.pad(row, ((0, b_pad - b), (0, 0)))          # padded tail rows discarded below

    out = pl.pallas_call(
        _item_rep_kernel,
        out_shape=jax.ShapeDtypeStruct((b_pad, out_dim), jnp.float32),
        grid=(steps,),
        in_specs=[
            pl.BlockSpec((tb, f), lambda i: (i, 0)),
            pl.BlockSpec(w_row.shape, lambda i: (0, 0)),
            pl.BlockSpec(w_emb.shape, lambda i: (0, 0)),
            pl.BlockSpec(b_packed.shape, lambda i: (0, 0)),
        ],
        out_specs=pl.BlockSpec((tb, out_dim), lambda i: (i, 0)),
        compiler_params=pltpu.CompilerParams(
            dimension_semantics=("parallel",)),
    )(row, w_row, w_emb, b_packed)

    return out[:b] if b_pad != b else out


def _reference(data, emb_table, lin_weight, lin_bias):
    year_idx = data[:, 0, 1].astype(jnp.int32)
    genres = data[:, 0, 2:].astype(jnp.float32)
    emb_out = emb_table[year_idx]
    lin_out = genres @ lin_weight.T + lin_bias
    return jnp.concatenate([emb_out, lin_out], axis=1)


def _make_data(key, batch, seq):
    k_year, k_genre = jax.random.split(key)
    year_ids = jax.random.randint(k_year, (batch,), 0, NUM_ITEMS).astype(jnp.float32)
    genre_feats = (jax.random.uniform(k_genre, (batch, NUM_GENRES)) < 0.3).astype(jnp.float32)
    data = jnp.zeros((batch, seq, 2 + NUM_GENRES), jnp.float32)
    data = data.at[:, 0, 1].set(year_ids)
    data = data.at[:, 0, 2:].set(genre_feats)
    return data


if __name__ == "__main__":
    key = jax.random.PRNGKey(0)
    k_emb, k_w, k_b, k_small, k_large = jax.random.split(key, 5)

    # Deterministic parameter init (shapes from __init__).
    emb_table = jax.random.normal(k_emb, (NUM_ITEMS, EMB_SIZE), jnp.float32) * 0.02
    lin_weight = jax.random.normal(k_w, (EMB_SIZE, NUM_GENRES), jnp.float32) * 0.1
    lin_bias = jax.random.normal(k_b, (EMB_SIZE,), jnp.float32) * 0.01

    # Pack once at init time (transpose + split block layout hoisted out of forward).
    w_row, w_emb, b_packed = pack_item_rep_params(emb_table, lin_weight, lin_bias)

    # --- small batch (single-shot path) ---
    data = _make_data(k_small, BATCH, SEQ)
    out = jax.block_until_ready(
        initial_recommender_item_rep(data, w_row, w_emb, b_packed))
    ref = _reference(data, emb_table, lin_weight, lin_bias)
    assert out.shape == (BATCH, 2 * EMB_SIZE), out.shape
    assert jnp.allclose(out, ref, atol=1e-4, rtol=1e-4), float(jnp.max(jnp.abs(out - ref)))

    # --- large ragged batch (pipelined grid path, non-divisible by tile_b) ---
    B_LARGE = 2304
    data_l = _make_data(k_large, B_LARGE, SEQ)
    out_l = jax.block_until_ready(
        initial_recommender_item_rep(data_l, w_row, w_emb, b_packed))
    ref_l = _reference(data_l, emb_table, lin_weight, lin_bias)
    assert out_l.shape == (B_LARGE, 2 * EMB_SIZE), out_l.shape
    assert jnp.allclose(out_l, ref_l, atol=1e-4, rtol=1e-4), float(jnp.max(jnp.abs(out_l - ref_l)))

    print("KERNEL_OK")
</pallas_src>

<mosaic_0001>
module attributes {stable_mosaic.version = 11 : i64} {
  func.func @_item_rep_kernel(%arg0: memref<8x20xf32, #tpu.memory_space<vmem>>, %arg1: memref<20x64xf32, #tpu.memory_space<vmem>>, %arg2: memref<64x64xf32, #tpu.memory_space<vmem>>, %arg3: memref<1x64xf32, #tpu.memory_space<vmem>>, %arg4: memref<8x64xf32, #tpu.memory_space<vmem>>) attributes {dimension_semantics = [], scalar_prefetch = 0 : i64, scratch_operands = 0 : i64, tpu.core_type = #tpu.core_type<tc>} {
    %c0 = arith.constant 0 : index
    %c0_0 = arith.constant 0 : index
    %0 = vector.load %arg0[%c0, %c0_0] : memref<8x20xf32, #tpu.memory_space<vmem>>, vector<8x20xf32>
    %1 = vector.extract_strided_slice %0 {offsets = [0, 1], sizes = [8, 1], strides = [1, 1]} : vector<8x20xf32> to vector<8x1xf32>
    %2 = arith.fptosi %1 : vector<8x1xf32> to vector<8x1xi32>
    %3 = tpu.iota {dimensions = array<i32: 1>} : vector<8x64xi32>
    %4 = vector.broadcast %2 : vector<8x1xi32> to vector<8x64xi32>
    %5 = arith.cmpi eq, %3, %4 : vector<8x64xi32>
    %6 = arith.extui %5 : vector<8x64xi1> to vector<8x64xi32>
    %7 = arith.sitofp %6 : vector<8x64xi32> to vector<8x64xf32>
    %c0_1 = arith.constant 0 : index
    %c0_2 = arith.constant 0 : index
    %8 = vector.load %arg1[%c0_1, %c0_2] : memref<20x64xf32, #tpu.memory_space<vmem>>, vector<20x64xf32>
    %cst = arith.constant dense<0.000000e+00> : vector<8x64xf32>
    %9 = tpu.matmul %0, %8, %cst {dimension_numbers = #tpu.dot_dimension_numbers<[1], [0], [0], [1], [0, 0, 1, 1], [], []>} : vector<8x20xf32>, vector<20x64xf32>, vector<8x64xf32> -> vector<8x64xf32>
    %c0_3 = arith.constant 0 : index
    %c0_4 = arith.constant 0 : index
    %10 = vector.load %arg2[%c0_3, %c0_4] : memref<64x64xf32, #tpu.memory_space<vmem>>, vector<64x64xf32>
    %cst_5 = arith.constant dense<0.000000e+00> : vector<8x64xf32>
    %11 = tpu.matmul %7, %10, %cst_5 {dimension_numbers = #tpu.dot_dimension_numbers<[1], [0], [0], [1], [0, 0, 1, 1], [], []>} : vector<8x64xf32>, vector<64x64xf32>, vector<8x64xf32> -> vector<8x64xf32>
    %12 = arith.addf %9, %11 : vector<8x64xf32>
    %c0_6 = arith.constant 0 : index
    %c0_7 = arith.constant 0 : index
    %13 = vector.load %arg3[%c0_6, %c0_7] : memref<1x64xf32, #tpu.memory_space<vmem>>, vector<1x64xf32>
    %14 = vector.broadcast %13 : vector<1x64xf32> to vector<8x64xf32>
    %15 = arith.addf %12, %14 : vector<8x64xf32>
    %c0_8 = arith.constant 0 : index
    %c0_9 = arith.constant 0 : index
    %16 = vector.load %arg4[%c0_8, %c0_9] : memref<8x64xf32, #tpu.memory_space<vmem>>, vector<8x64xf32>
    tpu.vector_store %arg4[%c0_8, %c0_9], %15 {strides = array<i32>} : memref<8x64xf32, #tpu.memory_space<vmem>>, vector<8x64xf32>,
    return
  }
}

</mosaic_0001>

<llo_original>
// kernel: tpu_custom_call.1
$region0: #{tpu_custom_call.1}
  #allocation0 [shape = 'u32[]', space=smem, size = 0x4, offset = 0x4, fixed_abs, tag = 'smem constant byte address 0x4 - core index']
  #allocation1 [shape = 'u32[144,128]{1,0:T(1,128)}', space=vmem, size = 0x12000, scoped, tag = 'internal scratch']
  %s0 = inlined_call_operand.hbm [shape: f32[8,20], index: 0, kind: input, shape index: {}]
  %s1 = inlined_call_operand.hbm [shape: f32[20,64], index: 1, kind: input, shape index: {}]
  %s2 = inlined_call_operand.hbm [shape: f32[64,64], index: 2, kind: input, shape index: {}]
  %s3 = inlined_call_operand.vmem [shape: f32[1,64], index: 3, kind: input, shape index: {}]
  %s4 = inlined_call_operand.hbm [shape: f32[8,64], index: 4, kind: output, shape index: {}]
  %s5 = sld [smem:[#allocation0]]
  $region38: #{tpu_custom_call.1} parent=0
    _
  %s7 = ssub.s32 1, %s5
  %s8 = scalar_select 0, %s7, %s5
  $region1: #{tpu_custom_call.1} parent=0
    #allocation2 [shape = 'u8[4096]{0}', space=vmem, size = 0x1000, scoped, tag = 'input window, operand 0, single buffered']
    #allocation3 [shape = 's32[1]{0}', space=sflag, size = 0x4, scoped, tag = 'scoped memory for tpu_custom_call.1']
    #allocation4 [shape = 's32[1]{0}', space=sflag, size = 0x4, scoped, tag = 'scoped memory for tpu_custom_call.1']
    #allocation5 [shape = 'u8[12288]{0}', space=vmem, size = 0x3000, scoped, tag = 'input window, operand 1, single buffered']
    #allocation6 [shape = 's32[1]{0}', space=sflag, size = 0x4, scoped, tag = 'scoped memory for tpu_custom_call.1']
    #allocation7 [shape = 'u8[32768]{0}', space=vmem, size = 0x8000, scoped, tag = 'input window, operand 2, single buffered']
    #allocation8 [shape = 'u8[4096]{0}', space=vmem, size = 0x1000, scoped, tag = 'output window, operand 0, single buffered']
    %9 = vsyncpa [#allocation3], 0
    %10 = vsyncpa [#allocation6], 0
    %11 = vsyncpa [#allocation4], 0
    // Predicated region
    $region2: #{tpu_custom_call.1} parent=1 // pred_check
      _
    $region3: #{tpu_custom_call.1} parent=1 // pred_check_branch
      %13 = sbr.rel (0) target = $region5
    $region4: #{tpu_custom_call.1} parent=1 // pred_region
      %s15 = ssub.s32 128, 128
      %16 = vsyncadd [#allocation3], %s15
      %s18 = sshll.u32 [#allocation2], 4
      %s19 = int_to_ptr.vmem [resolvable:$true] %s18
      %21 = dma.hbm_to_vmem [thread:$0]  %s0, 128, %s19, [#allocation3]
    $region5: #{tpu_custom_call.1} parent=1 // pred_fallthru
      _
    // Predicated region
    $region6: #{tpu_custom_call.1} parent=1 // pred_check
      _
    $region7: #{tpu_custom_call.1} parent=1 // pred_check_branch
      %23 = sbr.rel (0) target = $region9
    $region8: #{tpu_custom_call.1} parent=1 // pred_region
      %s25 = ssub.s32 384, 384
      %26 = vsyncadd [#allocation6], %s25
      %s27 = sshll.u32 [#allocation5], 4
      %s28 = int_to_ptr.vmem [resolvable:$true] %s27
      %33 = dma.hbm_to_vmem [thread:$0]  %s1, 384, %s28, [#allocation6], 128, 128, 8
    $region9: #{tpu_custom_call.1} parent=1 // pred_fallthru
      _
    // Predicated region
    $region10: #{tpu_custom_call.1} parent=1 // pred_check
      _
    $region11: #{tpu_custom_call.1} parent=1 // pred_check_branch
      %35 = sbr.rel (0) target = $region13
    $region12: #{tpu_custom_call.1} parent=1 // pred_region
      %s37 = ssub.s32 1024, 1024
      %38 = vsyncadd [#allocation6], %s37
      %s39 = sshll.u32 [#allocation7], 4
      %s40 = int_to_ptr.vmem [resolvable:$true] %s39
      %45 = dma.hbm_to_vmem [thread:$0]  %s2, 1024, %s40, [#allocation6], 128, 128, 8
    $region13: #{tpu_custom_call.1} parent=1 // pred_fallthru
      _
    // Predicated region
    $region14: #{tpu_custom_call.1} parent=1 // pred_check
      _
    $region15: #{tpu_custom_call.1} parent=1 // pred_check_branch
      %47 = sbr.rel (0) target = $region17
    $region16: #{tpu_custom_call.1} parent=1 // pred_region
      _
    $region17: #{tpu_custom_call.1} parent=1 // pred_fallthru
      _
    // Predicated region
    $region18: #{tpu_custom_call.1} parent=1 // pred_check
      _
    $region19: #{tpu_custom_call.1} parent=1 // pred_check_branch
      %49 = sbr.rel (0) target = $region21
    $region20: #{tpu_custom_call.1} parent=1 // pred_region
      %50 = dma.done [#allocation3], 128
    $region21: #{tpu_custom_call.1} parent=1 // pred_fallthru
      _
    // Predicated region
    $region22: #{tpu_custom_call.1} parent=1 // pred_check
      _
    $region23: #{tpu_custom_call.1} parent=1 // pred_check_branch
      %52 = sbr.rel (0) target = $region25
    $region24: #{tpu_custom_call.1} parent=1 // pred_region
      %53 = dma.done [#allocation6], 384
    $region25: #{tpu_custom_call.1} parent=1 // pred_fallthru
      _
    // Predicated region
    $region26: #{tpu_custom_call.1} parent=1 // pred_check
      _
    $region27: #{tpu_custom_call.1} parent=1 // pred_check_branch
      %55 = sbr.rel (0) target = $region29
    $region28: #{tpu_custom_call.1} parent=1 // pred_region
      %56 = dma.done [#allocation6], 1024
    $region29: #{tpu_custom_call.1} parent=1 // pred_fallthru
      _
    %v57 = vld [vmem:[#allocation2] sm:$0xff]
    %v58 = vcvt.f32.s32.to.zero.pseudo %v57
    %v59 = vlaneseq
    %v60 = vand.u32 %v59, 127
    %61 = vset.pattern.permute.xlu0 1
    %62 = vperm.xlu0 %61, %v58
    %v63 = vpop.permute.xlu0 %62
    %vm64 = vcmp.eq.s32.totalorder %v60, %v63
    %v65 = vsel %vm64, 1, 0
    %v66 = vcvt.s32.f32 %v65
    %v67 = vld [vmem:[#allocation5] sm:$0xff]
    %v68 = vld [vmem:[#allocation5 + $0x8] sm:$0xff]
    %v69 = vld [vmem:[#allocation5 + $0x10] sm:$0xf]
    %v70 = vld [vmem:[#allocation7] sm:$0xff]
    %v71 = vld [vmem:[#allocation7 + $0x8] sm:$0xff]
    %v72 = vld [vmem:[#allocation7 + $0x10] sm:$0xff]
    %v73 = vld [vmem:[#allocation7 + $0x18] sm:$0xff]
    %v74 = vld [vmem:[#allocation7 + $0x20] sm:$0xff]
    %v75 = vld [vmem:[#allocation7 + $0x28] sm:$0xff]
    %v76 = vld [vmem:[#allocation7 + $0x30] sm:$0xff]
    %v77 = vld [vmem:[#allocation7 + $0x38] sm:$0xff]
    %vm78 = vcmask 523264
    %v80 = vsel %vm78, %v66, 0
    %82 = vmatprep.subr.mxu0 0.0
    %83 = vmatpush1.msra.mxu0 %v70
    %84 = vmatprep.subr.mxu0 0.0
    %85 = vmatpush1.msra.mxu0 %v71
    %86 = vmatprep.subr.mxu0 0.0
    %87 = vmatpush1.msra.mxu0 %v72
    %88 = vmatprep.subr.mxu0 0.0
    %89 = vmatpush1.msra.mxu0 %v73
    %90 = vmatprep.subr.mxu0 0.0
    %91 = vmatpush1.msra.mxu0 %v74
    %92 = vmatprep.subr.mxu0 0.0
    %93 = vmatpush1.msra.mxu0 %v75
    %94 = vmatprep.subr.mxu0 0.0
    %95 = vmatpush1.msra.mxu0 %v76
    %96 = vmatprep.subr.mxu0 0.0
    %97 = vmatpush1.msra.mxu0 %v77
    %98 = vmatprep.subr.mxu0 0.0
    %99 = vmatpush1.msra.mxu0 0.0
    %100 = vmatprep.subr.mxu0 0.0
    %101 = vmatpush1.msra.mxu0 0.0
    %102 = vmatprep.subr.mxu0 0.0
    %103 = vmatpush1.msra.mxu0 0.0
    %104 = vmatprep.subr.mxu0 0.0
    %105 = vmatpush1.msra.mxu0 0.0
    %106 = vmatprep.subr.mxu0 0.0
    %107 = vmatpush1.msra.mxu0 0.0
    %108 = vmatprep.subr.mxu0 0.0
    %109 = vmatpush1.msra.mxu0 0.0
    %110 = vmatprep.subr.mxu0 0.0
    %111 = vmatpush1.msra.mxu0 0.0
    %112 = vmatprep.subr.mxu0 0.0
    %113 = vmatpush1.msra.mxu0 0.0
    %114 = vmatprep.subr.mxu0 0.0
    %115 = vmatpush1.msra.mxu0 0.0
    %116 = vmatprep.subr.mxu0 0.0
    %117 = vmatpush1.msra.mxu0 0.0
    %118 = vmatprep.subr.mxu0 0.0
    %119 = vmatpush1.msra.mxu0 0.0
    %120 = vmatprep.subr.mxu0 0.0
    %121 = vmatpush1.msra.mxu0 0.0
    %122 = vmatprep.subr.mxu0 0.0
    %123 = vmatpush1.msra.mxu0 0.0
    %124 = vmatprep.subr.mxu0 0.0
    %125 = vmatpush1.msra.mxu0 0.0
    %126 = vmatprep.subr.mxu0 0.0
    %127 = vmatpush1.msra.mxu0 0.0
    %128 = vmatprep.subr.mxu0 0.0
    %129 = vmatpush1.msra.mxu0 0.0
    %130 = vmatprep.subr.mxu0 0.0
    %131 = vmatpush1.msra.mxu0 0.0
    %132 = vmatprep.subr.mxu0 0.0
    %133 = vmatpush1.msra.mxu0 0.0
    %134 = vmatprep.subr.mxu0 0.0
    %135 = vmatpush1.msra.mxu0 0.0
    %136 = vmatprep.subr.mxu0 0.0
    %137 = vmatpush1.msra.mxu0 0.0
    %138 = vmatprep.subr.mxu0 0.0
    %139 = vmatpush1.msra.mxu0 0.0
    %140 = vmatprep.subr.mxu0 0.0
    %141 = vmatpush1.msra.mxu0 0.0
    %142 = vmatprep.subr.mxu0 0.0
    %143 = vmatpush1.msra.mxu0 0.0
    %144 = vmatprep.subr.mxu0 0.0
    %145 = vmatpush1.msra.mxu0 0.0
    %146 = vmatprep.mubr.f32.mxu0 0.0
    %147 = vmatmul.mubr.f32.gmra.mrb[0].mxu0 %v80
    %v148 = vpop.f32.mrb[0].mxu0
    %v149 = vadd.f32 0.0, %v148
    %v150 = vpop.f32.mrb[0].mxu0
    %151 = vdwg.mxu0
    %vm152 = vcmask 162816
    %v154 = vsel %vm152, %v57, 0
    %vm156 = vcmask 1043456
    %v158 = vsel %vm156, %v69, 0
    %160 = vmatprep.subr.mxu0 0.0
    %161 = vmatpush1.msra.mxu0 %v67
    %162 = vmatprep.subr.mxu0 0.0
    %163 = vmatpush1.msra.mxu0 %v68
    %164 = vmatprep.subr.mxu0 0.0
    %165 = vmatpush1.msra.mxu0 %v158
    %166 = vmatprep.subr.mxu0 0.0
    %167 = vmatpush1.msra.mxu0 0.0
    %168 = vmatprep.subr.mxu0 0.0
    %169 = vmatpush1.msra.mxu0 0.0
    %170 = vmatprep.subr.mxu0 0.0
    %171 = vmatpush1.msra.mxu0 0.0
    %172 = vmatprep.subr.mxu0 0.0
    %173 = vmatpush1.msra.mxu0 0.0
    %174 = vmatprep.subr.mxu0 0.0
    %175 = vmatpush1.msra.mxu0 0.0
    %176 = vmatprep.subr.mxu0 0.0
    %177 = vmatpush1.msra.mxu0 0.0
    %178 = vmatprep.subr.mxu0 0.0
    %179 = vmatpush1.msra.mxu0 0.0
    %180 = vmatprep.subr.mxu0 0.0
    %181 = vmatpush1.msra.mxu0 0.0
    %182 = vmatprep.subr.mxu0 0.0
    %183 = vmatpush1.msra.mxu0 0.0
    %184 = vmatprep.subr.mxu0 0.0
    %185 = vmatpush1.msra.mxu0 0.0
    %186 = vmatprep.subr.mxu0 0.0
    %187 = vmatpush1.msra.mxu0 0.0
    %188 = vmatprep.subr.mxu0 0.0
    %189 = vmatpush1.msra.mxu0 0.0
    %190 = vmatprep.subr.mxu0 0.0
    %191 = vmatpush1.msra.mxu0 0.0
    %192 = vmatprep.subr.mxu0 0.0
    %193 = vmatpush1.msra.mxu0 0.0
    %194 = vmatprep.subr.mxu0 0.0
    %195 = vmatpush1.msra.mxu0 0.0
    %196 = vmatprep.subr.mxu0 0.0
    %197 = vmatpush1.msra.mxu0 0.0
    %198 = vmatprep.subr.mxu0 0.0
    %199 = vmatpush1.msra.mxu0 0.0
    %200 = vmatprep.subr.mxu0 0.0
    %201 = vmatpush1.msra.mxu0 0.0
    %202 = vmatprep.subr.mxu0 0.0
    %203 = vmatpush1.msra.mxu0 0.0
    %204 = vmatprep.subr.mxu0 0.0
    %205 = vmatpush1.msra.mxu0 0.0
    %206 = vmatprep.subr.mxu0 0.0
    %207 = vmatpush1.msra.mxu0 0.0
    %208 = vmatprep.subr.mxu0 0.0
    %209 = vmatpush1.msra.mxu0 0.0
    %210 = vmatprep.subr.mxu0 0.0
    %211 = vmatpush1.msra.mxu0 0.0
    %212 = vmatprep.subr.mxu0 0.0
    %213 = vmatpush1.msra.mxu0 0.0
    %214 = vmatprep.subr.mxu0 0.0
    %215 = vmatpush1.msra.mxu0 0.0
    %216 = vmatprep.subr.mxu0 0.0
    %217 = vmatpush1.msra.mxu0 0.0
    %218 = vmatprep.subr.mxu0 0.0
    %219 = vmatpush1.msra.mxu0 0.0
    %220 = vmatprep.subr.mxu0 0.0
    %221 = vmatpush1.msra.mxu0 0.0
    %222 = vmatprep.subr.mxu0 0.0
    %223 = vmatpush1.msra.mxu0 0.0
    %224 = vmatprep.mubr.f32.mxu0 0.0
    %225 = vmatmul.mubr.f32.gmra.mrb[0].mxu0 %v154
    %v226 = vpop.f32.mrb[0].mxu0
    %v227 = vadd.f32 %v149, %v226
    %v228 = vpop.f32.mrb[0].mxu0
    %229 = vdwg.mxu0
    %v230 = vld [vmem:[%s3] sm:$0x1]
    %v232 = vlaneseq
    %v233 = vshrl.u32 %v232, 7
    %v234 = vsub.s32 0, %v233
    %v235 = vrot.slane %v230, %v234
    %v237 = vadd.f32 %v227, %v235
    %238 = vst.msk [vmem:[#allocation8] sm:$0xff] %vm78, %v237
    // Predicated region
    $region30: #{tpu_custom_call.1} parent=1 // pred_check
      _
    $region31: #{tpu_custom_call.1} parent=1 // pred_check_branch
      %240 = sbr.rel (0) target = $region33
    $region32: #{tpu_custom_call.1} parent=1 // pred_region
      %s242 = ssub.s32 128, 128
      %243 = vsyncadd [#allocation4], %s242
      %s245 = sshll.u32 [#allocation8], 4
      %s246 = int_to_ptr.vmem [resolvable:$true] %s245
      %248 = dma.vmem_to_hbm [thread:$0]  %s246, 128, %s4, [#allocation4]
    $region33: #{tpu_custom_call.1} parent=1 // pred_fallthru
      _
    // Predicated region
    $region34: #{tpu_custom_call.1} parent=1 // pred_check
      _
    $region35: #{tpu_custom_call.1} parent=1 // pred_check_branch
      %250 = sbr.rel (0) target = $region37
    $region36: #{tpu_custom_call.1} parent=1 // pred_region
      %251 = dma.done [#allocation4], 128
    $region37: #{tpu_custom_call.1} parent=1 // pred_fallthru
      _
    %252 = vsyncpa [#allocation3], 1
    %253 = vsyncpa [#allocation6], 1
    %254 = vsyncpa [#allocation4], 1

</llo_original>
